<compile_context>
chip_gen: v7x
topology: tpu7x:2x2x1
jax: 0.10.0
libtpu: 0.0.40
codegen_flags: <defaults>
</compile_context>

<pallas_src>
import functools

import jax
import jax.numpy as jnp
from jax.experimental import pallas as pl
from jax.experimental.pallas import tpu as pltpu


def _round_up(x, n):
    return ((x + n - 1) // n) * n


def _mask_k_tail(x, w, k_start, k_extent):
    """Zero the K-overhang columns of x and rows of w.

    Pallas fills out-of-bounds input padding with *unspecified* values which
    could be NaN/Inf; since 0 * Inf = NaN would corrupt valid output elements,
    both operands of the contraction are zeroed over the overhang.
    """
    kcol = k_start + jax.lax.broadcasted_iota(jnp.int32, x.shape, 1)
    x = jnp.where(kcol < k_extent, x, jnp.zeros_like(x))
    krow = k_start + jax.lax.broadcasted_iota(jnp.int32, w.shape, 0)
    w = jnp.where(krow < k_extent, w, jnp.zeros_like(w))
    return x, w


def _rbm_fwd_single_k_kernel(x_ref, w_ref, b_ref, o_ref, *, k_extent, has_k_tail):
    """One (tm, tn) tile of sigmoid(x @ W + b); the whole K dim fits one block."""
    x = x_ref[...]
    w = w_ref[...]
    if has_k_tail:  # static: only generated when the K block overhangs d
        x, w = _mask_k_tail(x, w, 0, k_extent)
    z = jnp.dot(x.astype(jnp.bfloat16), w.astype(jnp.bfloat16),
                preferred_element_type=jnp.float32)
    z = z + b_ref[...].astype(jnp.float32)  # (1, tn) broadcast
    # NOTE: M/N-overhang lanes of this tile may hold garbage derived from
    # unspecified input padding; Pallas discards the out-of-bounds portion of
    # the store, which is what makes this safe.  Do NOT reroute this result
    # through an unmasked scratch write in a future refactor.
    o_ref[...] = jax.nn.sigmoid(z).astype(o_ref.dtype)


def _rbm_fwd_multi_k_kernel(x_ref, w_ref, b_ref, o_ref, acc_ref, *,
                            k_extent, tk, has_k_tail):
    """(tm, tn) tile of sigmoid(x @ W + b), accumulating over the K grid axis."""
    k = pl.program_id(2)

    @pl.when(k == 0)
    def _():
        acc_ref[...] = jnp.zeros_like(acc_ref)

    x = x_ref[...]
    w = w_ref[...]
    if has_k_tail:  # static: only generated when d % tk != 0
        x, w = _mask_k_tail(x, w, k * tk, k_extent)
    acc_ref[...] += jnp.dot(x.astype(jnp.bfloat16), w.astype(jnp.bfloat16),
                            preferred_element_type=jnp.float32)

    @pl.when(k == pl.num_programs(2) - 1)
    def _():
        z = acc_ref[...] + b_ref[...].astype(jnp.float32)
        # Same M/N-overhang note as the single-K kernel applies here.
        o_ref[...] = jax.nn.sigmoid(z).astype(o_ref.dtype)


@functools.partial(jax.jit, static_argnames=("tm", "tn", "tk", "out_dtype"))
def _rbm_forward_impl(x, w, b, *, tm, tn, tk, out_dtype):
    m, d = x.shape
    _, h = w.shape
    num_k = pl.cdiv(d, tk)
    has_k_tail = (num_k * tk != d)
    grid_m, grid_n = pl.cdiv(m, tm), pl.cdiv(h, tn)
    total_steps = grid_m * grid_n * num_k

    # Deeper buffering on the streamed operands only pays off (and only costs
    # VMEM) when there are enough grid steps to pipeline.
    io_pipeline = pl.Buffered(3) if total_steps >= 4 else None

    def io_spec(block_shape, index_map):
        if io_pipeline is None:
            return pl.BlockSpec(block_shape, index_map)
        return pl.BlockSpec(block_shape, index_map, pipeline_mode=io_pipeline)

    cost = pl.CostEstimate(
        flops=2 * m * h * d,
        transcendentals=m * h,
        bytes_accessed=(x.size * x.dtype.itemsize
                        + w.size * w.dtype.itemsize
                        + b.size * b.dtype.itemsize
                        + m * h * jnp.dtype(out_dtype).itemsize),
    )

    if num_k == 1:
        # Common DBN case (d <= tile_k): no K axis, no accumulator scratch,
        # no init/finalize control flow.
        kernel = functools.partial(_rbm_fwd_single_k_kernel,
                                   k_extent=d, has_k_tail=has_k_tail)
        grid = (grid_m, grid_n)
        in_specs = [
            io_spec((tm, tk), lambda i, j: (i, 0)),   # x tile
            io_spec((tk, tn), lambda i, j: (0, j)),   # W tile
            pl.BlockSpec((1, tn), lambda i, j: (0, j)),  # bias tile
        ]
        out_specs = pl.BlockSpec((tm, tn), lambda i, j: (i, j))
        scratch_shapes = []
        dims = ("parallel", "parallel")
    else:
        kernel = functools.partial(_rbm_fwd_multi_k_kernel,
                                   k_extent=d, tk=tk, has_k_tail=has_k_tail)
        grid = (grid_m, grid_n, num_k)
        in_specs = [
            io_spec((tm, tk), lambda i, j, k: (i, k)),   # x tile
            io_spec((tk, tn), lambda i, j, k: (k, j)),   # W tile
            pl.BlockSpec((1, tn), lambda i, j, k: (0, j)),  # bias tile
        ]
        out_specs = pl.BlockSpec((tm, tn), lambda i, j, k: (i, j))
        scratch_shapes = [pltpu.VMEM((tm, tn), jnp.float32)]  # f32 accumulator
        dims = ("parallel", "parallel", "arbitrary")

    return pl.pallas_call(
        kernel,
        out_shape=jax.ShapeDtypeStruct((m, h), out_dtype),
        grid_spec=pltpu.PrefetchScalarGridSpec(
            num_scalar_prefetch=0,
            grid=grid,
            in_specs=in_specs,
            out_specs=out_specs,
            scratch_shapes=scratch_shapes,
        ),
        compiler_params=pltpu.CompilerParams(
            dimension_semantics=dims,
            # Re-derived for v7x (64 MiB/TC): worst-case live buffers at the
            # default tiles are well under this.
            vmem_limit_bytes=32 * 1024 * 1024,
        ),
        cost_estimate=cost,
    )(x, w, b)


def rbm_forward(x, w, hidden_bias, *, tile_m=512, tile_n=512, tile_k=1024,
                out_dtype=None):
    """Pallas-backed RBM forward: sigmoid(x @ W + hidden_bias).

    x / W stream in their stored dtypes (no wrapper-side copies); the MXU runs
    in bf16 with f32 accumulation — a deliberate precision trade appropriate
    for sigmoid activations (~1e-3 abs error on the output).
    """
    m, d = x.shape
    d2, h = w.shape
    assert d == d2, (d, d2)
    if out_dtype is None:
        out_dtype = x.dtype

    # Bias is tiny: reshape/cast once here (negligible traffic).
    b = hidden_bias.reshape(1, h).astype(jnp.float32)

    # Clamp tiles to the (alignment-rounded) problem size.  tm rounds to 16 so
    # bf16 row packing needs no edge handling; tn/tk stay multiples of 128 for
    # lane-dense loads/stores.
    tm = min(tile_m, _round_up(m, 16))
    tn = min(tile_n, _round_up(h, 128))
    tk = min(tile_k, _round_up(d, 128))

    # v7x megacore: try to expose >= 2 blocks along the parallel (M, N) axes so
    # both TensorCores get work instead of one idling.
    if pl.cdiv(m, tm) * pl.cdiv(h, tn) < 2:
        if _round_up(h, 128) >= 256:
            tn = _round_up(pl.cdiv(h, 2), 128)
        elif _round_up(m, 16) >= 32:
            tm = _round_up(pl.cdiv(m, 2), 16)
        # else: problem too small to split; a single block is fine.

    return _rbm_forward_impl(x, w, b, tm=tm, tn=tn, tk=tk, out_dtype=out_dtype)


class RBMParams:
    """Deterministic stand-in for the PyTorch RBM's parameters."""

    def __init__(self, key, num_visible, num_hidden):
        kw, = jax.random.split(key, 1)
        w = jax.random.normal(kw, (num_visible, num_hidden), jnp.float32) * 0.1
        # Weights stored persistently in bf16: the kernel streams them at
        # 2 B/elt with no per-call cast/copy (deliberate precision trade).
        self.weights = w.astype(jnp.bfloat16)
        self.visible_bias = jnp.full((num_visible,), 0.5, dtype=jnp.float32)
        self.hidden_bias = jnp.zeros((num_hidden,), dtype=jnp.float32)
        self.weights_momentum = jnp.zeros((num_visible, num_hidden), jnp.float32)
        self.visible_bias_momentum = jnp.zeros((num_visible,), jnp.float32)
        self.hidden_bias_momentum = jnp.zeros((num_hidden,), jnp.float32)

    def forward(self, x):
        return rbm_forward(x, self.weights, self.hidden_bias)


class DBN:
    """JAX/Pallas port of the PyTorch DBN module (forward only)."""

    def __init__(self, key, num_visible=128, num_hidden=(128, 128)):
        self.n_layers = len(num_hidden)
        keys = jax.random.split(key, self.n_layers)
        self.rbm_layers = []
        for i in range(self.n_layers):
            input_size = num_visible if i == 0 else num_hidden[i - 1]
            self.rbm_layers.append(RBMParams(keys[i], input_size, num_hidden[i]))
        # Extra registered parameters of the reference module (unused in forward).
        self.W_rec = [self.rbm_layers[i].weights for i in range(self.n_layers - 1)]
        self.W_gen = [self.rbm_layers[i].weights for i in range(self.n_layers - 1)]
        self.bias_rec = [self.rbm_layers[i].hidden_bias for i in range(self.n_layers - 1)]
        self.bias_gen = [self.rbm_layers[i].visible_bias for i in range(self.n_layers - 1)]
        self.W_mem = self.rbm_layers[-1].weights_momentum
        self.v_bias_mem = self.rbm_layers[-1].visible_bias_momentum
        self.h_bias_mem = self.rbm_layers[-1].hidden_bias_momentum

    def forward(self, train_loader, train_dataset, batch_size=64, num_epochs=3):
        # The PyTorch reference applies every RBM to `train_dataset` and keeps
        # only the last layer's output.  RBM.forward is pure, so the earlier
        # calls are dead work — computing only the final layer is semantically
        # identical and removes (n_layers - 1) redundant GEMMs + HBM traffic.
        return self.rbm_layers[-1].forward(train_dataset)

    # TODO(synk): train_static / Testing (contrastive-divergence training and
    # DataLoader feature extraction) are not part of forward and are not ported.


if __name__ == "__main__":
    key = jax.random.PRNGKey(0)
    k_model, k_data, k_x2, k_w2, k_b2 = jax.random.split(key, 5)

    # Small shapes consistent with the module: num_visible == num_hidden[i]
    # so every RBM can consume the same dataset, as the reference forward does.
    batch, num_visible = 8, 128
    num_hidden = (128, 128)

    dbn = DBN(k_model, num_visible=num_visible, num_hidden=num_hidden)
    train_dataset = jax.random.uniform(
        k_data, (batch, num_visible), dtype=jnp.float32)

    out = dbn.forward(train_loader=None, train_dataset=train_dataset)
    out = jax.block_until_ready(out)

    # Correctness vs. plain-JAX reference of the same semantics (bf16 MXU ->
    # loosened tolerance).
    last = dbn.rbm_layers[-1]
    ref = jax.nn.sigmoid(
        train_dataset @ last.weights.astype(jnp.float32) + last.hidden_bias)
    assert out.shape == (batch, num_hidden[-1])
    assert jnp.allclose(out, ref, atol=2e-2), "DBN forward mismatch vs reference"

    # Extra check: uneven, non-tile-aligned shapes exercise the in-kernel
    # K-tail masking and the M/N overhang paths of the generalized kernel.
    m2, d2, h2 = 20, 200, 176
    x2 = jax.random.uniform(k_x2, (m2, d2), dtype=jnp.float32)
    w2 = jax.random.normal(k_w2, (d2, h2), dtype=jnp.float32) * 0.1
    b2 = jax.random.normal(k_b2, (h2,), dtype=jnp.float32) * 0.1
    out2 = jax.block_until_ready(rbm_forward(x2, w2, b2))
    ref2 = jax.nn.sigmoid(x2 @ w2 + b2)
    assert out2.shape == (m2, h2)
    assert jnp.allclose(out2, ref2, atol=2e-2), "uneven-shape mismatch vs reference"
    assert bool(jnp.all(jnp.isfinite(out2))), "non-finite values in masked-tail path"

    print("KERNEL_OK")
</pallas_src>

<mosaic_0001>
module attributes {stable_mosaic.version = 11 : i64} {
  func.func @_rbm_fwd_single_k_kernel(%arg0: i32, %arg1: i32, %arg2: memref<16x128xf32, #tpu.memory_space<vmem>>, %arg3: memref<128x128xbf16, #tpu.memory_space<vmem>>, %arg4: memref<1x128xf32, #tpu.memory_space<vmem>>, %arg5: memref<16x128xf32, #tpu.memory_space<vmem>>) attributes {dimension_semantics = [#tpu.dimension_semantics<parallel>, #tpu.dimension_semantics<parallel>], iteration_bounds = array<i64: 1, 1>, scalar_prefetch = 0 : i64, scratch_operands = 0 : i64, tpu.core_type = #tpu.core_type<tc>, window_params = [{transform_indices = @transform_0, window_bounds = array<i64: 16, 128>}, {transform_indices = @transform_1, window_bounds = array<i64: 128, 128>}, {transform_indices = @transform_2, window_bounds = array<i64: 1, 128>}, {transform_indices = @transform_3, window_bounds = array<i64: 16, 128>}]} {
    %c0 = arith.constant 0 : index
    %c0_0 = arith.constant 0 : index
    %0 = vector.load %arg2[%c0, %c0_0] : memref<16x128xf32, #tpu.memory_space<vmem>>, vector<16x128xf32>
    %c0_1 = arith.constant 0 : index
    %c0_2 = arith.constant 0 : index
    %1 = vector.load %arg3[%c0_1, %c0_2] : memref<128x128xbf16, #tpu.memory_space<vmem>>, vector<128x128xbf16>
    %2 = arith.truncf %0 : vector<16x128xf32> to vector<16x128xbf16>
    %cst = arith.constant dense<0.000000e+00> : vector<16x128xf32>
    %3 = tpu.matmul %2, %1, %cst {dimension_numbers = #tpu.dot_dimension_numbers<[1], [0], [0], [1], [0, 0, 1, 1], [], []>} : vector<16x128xbf16>, vector<128x128xbf16>, vector<16x128xf32> -> vector<16x128xf32>
    %c0_3 = arith.constant 0 : index
    %c0_4 = arith.constant 0 : index
    %4 = vector.load %arg4[%c0_3, %c0_4] : memref<1x128xf32, #tpu.memory_space<vmem>>, vector<1x128xf32>
    %5 = vector.broadcast %4 : vector<1x128xf32> to vector<16x128xf32>
    %6 = arith.addf %3, %5 : vector<16x128xf32>
    %7 = arith.negf %6 : vector<16x128xf32>
    %8 = math.exp %7 : vector<16x128xf32>
    %cst_5 = arith.constant 1.000000e+00 : f32
    %9 = vector.broadcast %cst_5 : f32 to vector<16x128xf32>
    %10 = arith.addf %9, %8 : vector<16x128xf32>
    %11 = arith.divf %9, %10 : vector<16x128xf32>
    %c0_6 = arith.constant 0 : index
    %c0_7 = arith.constant 0 : index
    %12 = vector.load %arg5[%c0_6, %c0_7] : memref<16x128xf32, #tpu.memory_space<vmem>>, vector<16x128xf32>
    tpu.vector_store %arg5[%c0_6, %c0_7], %11 {strides = array<i32>} : memref<16x128xf32, #tpu.memory_space<vmem>>, vector<16x128xf32>,
    return
  }
  func.func @transform_0(%arg0: i32, %arg1: i32) -> (i32, i32) {
    %c0_i32 = arith.constant 0 : i32
    %c0_i32_0 = arith.constant 0 : i32
    return %arg0, %c0_i32 : i32, i32
  }
  func.func @transform_1(%arg0: i32, %arg1: i32) -> (i32, i32) {
    %c0_i32 = arith.constant 0 : i32
    %c0_i32_0 = arith.constant 0 : i32
    return %c0_i32, %arg1 : i32, i32
  }
  func.func @transform_2(%arg0: i32, %arg1: i32) -> (i32, i32) {
    %c0_i32 = arith.constant 0 : i32
    %c0_i32_0 = arith.constant 0 : i32
    return %c0_i32, %arg1 : i32, i32
  }
  func.func @transform_3(%arg0: i32, %arg1: i32) -> (i32, i32) {
    %c0_i32 = arith.constant 0 : i32
    return %arg0, %arg1 : i32, i32
  }
}

</mosaic_0001>

<llo_original>
// kernel: _rbm_forward_impl.1
$region0: #{_rbm_forward_impl.1}
  #allocation0 [shape = 'u32[]', space=smem, size = 0x4, offset = 0x4, fixed_abs, tag = 'smem constant byte address 0x4 - core index']
  #allocation1 [shape = 'u32[144,128]{1,0:T(1,128)}', space=vmem, size = 0x12000, scoped, tag = 'internal scratch']
  %s0 = inlined_call_operand.hbm [shape: f32[8,128], index: 0, kind: input, shape index: {}]
  %s1 = inlined_call_operand.hbm [shape: bf16[128,128], index: 1, kind: input, shape index: {}]
  %s2 = inlined_call_operand.vmem [shape: f32[1,128], index: 2, kind: input, shape index: {}]
  %s3 = inlined_call_operand.hbm [shape: f32[8,128], index: 3, kind: output, shape index: {}]
  %s4 = sld [smem:[#allocation0]]
  $region30: #{_rbm_forward_impl.1} parent=0
    _
  %s6 = ssub.s32 1, %s4
  %s7 = scalar_select 0, %s6, %s4
  $region1: #{_rbm_forward_impl.1} parent=0
    #allocation2 [shape = 'u8[8192]{0}', space=vmem, size = 0x2000, scoped, tag = 'input window, operand 0, single buffered']
    #allocation3 [shape = 's32[1]{0}', space=sflag, size = 0x4, scoped, tag = 'scoped memory for _rbm_forward_impl.1']
    #allocation4 [shape = 's32[1]{0}', space=sflag, size = 0x4, scoped, tag = 'scoped memory for _rbm_forward_impl.1']
    #allocation5 [shape = 'u8[32768]{0}', space=vmem, size = 0x8000, scoped, tag = 'input window, operand 1, single buffered']
    #allocation6 [shape = 's32[1]{0}', space=sflag, size = 0x4, scoped, tag = 'scoped memory for _rbm_forward_impl.1']
    #allocation7 [shape = 'u8[8192]{0}', space=vmem, size = 0x2000, scoped, tag = 'output window, operand 0, single buffered']
    %8 = vsyncpa [#allocation3], 0
    %9 = vsyncpa [#allocation6], 0
    %10 = vsyncpa [#allocation4], 0
    // Predicated region
    $region2: #{_rbm_forward_impl.1} parent=1 // pred_check
      _
    $region3: #{_rbm_forward_impl.1} parent=1 // pred_check_branch
      %12 = sbr.rel (0) target = $region5
    $region4: #{_rbm_forward_impl.1} parent=1 // pred_region
      %s14 = ssub.s32 256, 128
      %15 = vsyncadd [#allocation3], %s14
      %s16 = sshll.u32 [#allocation2], 4
      %s17 = int_to_ptr.vmem [resolvable:$true] %s16
      %22 = dma.hbm_to_vmem [thread:$0]  %s0, 128, %s17, [#allocation3], 128, 128, 8
    $region5: #{_rbm_forward_impl.1} parent=1 // pred_fallthru
      _
    // Predicated region
    $region6: #{_rbm_forward_impl.1} parent=1 // pred_check
      _
    $region7: #{_rbm_forward_impl.1} parent=1 // pred_check_branch
      %24 = sbr.rel (0) target = $region9
    $region8: #{_rbm_forward_impl.1} parent=1 // pred_region
      %s26 = ssub.s32 1024, 1024
      %27 = vsyncadd [#allocation6], %s26
      %s28 = sshll.u32 [#allocation5], 4
      %s29 = int_to_ptr.vmem [resolvable:$true] %s28
      %34 = dma.hbm_to_vmem [thread:$0]  %s1, 1024, %s29, [#allocation6], 64, 64, 4
    $region9: #{_rbm_forward_impl.1} parent=1 // pred_fallthru
      _
    // Predicated region
    $region10: #{_rbm_forward_impl.1} parent=1 // pred_check
      _
    $region11: #{_rbm_forward_impl.1} parent=1 // pred_check_branch
      %36 = sbr.rel (0) target = $region13
    $region12: #{_rbm_forward_impl.1} parent=1 // pred_region
      _
    $region13: #{_rbm_forward_impl.1} parent=1 // pred_fallthru
      _
    // Predicated region
    $region14: #{_rbm_forward_impl.1} parent=1 // pred_check
      _
    $region15: #{_rbm_forward_impl.1} parent=1 // pred_check_branch
      %38 = sbr.rel (0) target = $region17
    $region16: #{_rbm_forward_impl.1} parent=1 // pred_region
      %39 = dma.done [#allocation3], 256
    $region17: #{_rbm_forward_impl.1} parent=1 // pred_fallthru
      _
    // Predicated region
    $region18: #{_rbm_forward_impl.1} parent=1 // pred_check
      _
    $region19: #{_rbm_forward_impl.1} parent=1 // pred_check_branch
      %41 = sbr.rel (0) target = $region21
    $region20: #{_rbm_forward_impl.1} parent=1 // pred_region
      %42 = dma.done [#allocation6], 1024
    $region21: #{_rbm_forward_impl.1} parent=1 // pred_fallthru
      _
    %v44 = vld [vmem:[#allocation2] sm:$0xff]
    %v45 = vld [vmem:[#allocation2 + $0x8] sm:$0xff]
    %v46 = vld [vmem:[#allocation5] sm:$0xf]
    %v47 = vld [vmem:[#allocation5 + $0x4] sm:$0xf]
    %v48 = vld [vmem:[#allocation5 + $0x8] sm:$0xf]
    %v49 = vld [vmem:[#allocation5 + $0xc] sm:$0xf]
    %v50 = vld [vmem:[#allocation5 + $0x10] sm:$0xf]
    %v51 = vld [vmem:[#allocation5 + $0x14] sm:$0xf]
    %v52 = vld [vmem:[#allocation5 + $0x18] sm:$0xf]
    %v53 = vld [vmem:[#allocation5 + $0x1c] sm:$0xf]
    %v54 = vld [vmem:[#allocation5 + $0x20] sm:$0xf]
    %v55 = vld [vmem:[#allocation5 + $0x24] sm:$0xf]
    %v56 = vld [vmem:[#allocation5 + $0x28] sm:$0xf]
    %v57 = vld [vmem:[#allocation5 + $0x2c] sm:$0xf]
    %v58 = vld [vmem:[#allocation5 + $0x30] sm:$0xf]
    %v59 = vld [vmem:[#allocation5 + $0x34] sm:$0xf]
    %v60 = vld [vmem:[#allocation5 + $0x38] sm:$0xf]
    %v61 = vld [vmem:[#allocation5 + $0x3c] sm:$0xf]
    %v62 = vpack.c.bf16 %v45, %v44
    %v63 = vld [vmem:[%s2] sm:$0x1]
    %v65 = vlaneseq
    %v66 = vshrl.u32 %v65, 7
    %v67 = vsub.s32 0, %v66
    %v68 = vrot.slane %v63, %v67
    %v86 = vunpack.c.l.b16 %v46
    %v87 = vunpack.c.l.b16 %v47
    %v88 = vunpack.c.l.b16 %v48
    %v89 = vunpack.c.l.b16 %v49
    %v90 = vunpack.c.l.b16 %v50
    %v91 = vunpack.c.l.b16 %v51
    %v92 = vunpack.c.l.b16 %v52
    %v93 = vunpack.c.l.b16 %v53
    %v94 = vunpack.c.l.b16 %v54
    %v95 = vunpack.c.l.b16 %v55
    %v96 = vunpack.c.l.b16 %v56
    %v97 = vunpack.c.l.b16 %v57
    %v98 = vunpack.c.l.b16 %v58
    %v99 = vunpack.c.l.b16 %v59
    %v100 = vunpack.c.l.b16 %v60
    %v101 = vunpack.c.l.b16 %v61
    %v102 = vpack.c.b16 %v87, %v86
    %v103 = vpack.c.b16 %v89, %v88
    %v104 = vpack.c.b16 %v91, %v90
    %v105 = vpack.c.b16 %v93, %v92
    %v106 = vpack.c.b16 %v95, %v94
    %v107 = vpack.c.b16 %v97, %v96
    %v108 = vpack.c.b16 %v99, %v98
    %v109 = vpack.c.b16 %v101, %v100
    %118 = vmatprep.subr.bf16.mxu0 0
    %119 = vmatpush1.bf16.msra.mxu0 %v102
    %120 = vmatprep.subr.bf16.mxu0 0
    %121 = vmatpush1.bf16.msra.mxu0 %v103
    %122 = vmatprep.subr.bf16.mxu0 0
    %123 = vmatpush1.bf16.msra.mxu0 %v104
    %124 = vmatprep.subr.bf16.mxu0 0
    %125 = vmatpush1.bf16.msra.mxu0 %v105
    %126 = vmatprep.subr.bf16.mxu0 0
    %127 = vmatpush1.bf16.msra.mxu0 %v106
    %128 = vmatprep.subr.bf16.mxu0 0
    %129 = vmatpush1.bf16.msra.mxu0 %v107
    %130 = vmatprep.subr.bf16.mxu0 0
    %131 = vmatpush1.bf16.msra.mxu0 %v108
    %132 = vmatprep.subr.bf16.mxu0 0
    %133 = vmatpush1.bf16.msra.mxu0 %v109
    %134 = vmatprep.subr.bf16.mxu0 0
    %135 = vmatpush1.bf16.msra.mxu0 0
    %136 = vmatprep.subr.bf16.mxu0 0
    %137 = vmatpush1.bf16.msra.mxu0 0
    %138 = vmatprep.subr.bf16.mxu0 0
    %139 = vmatpush1.bf16.msra.mxu0 0
    %140 = vmatprep.subr.bf16.mxu0 0
    %141 = vmatpush1.bf16.msra.mxu0 0
    %142 = vmatprep.subr.bf16.mxu0 0
    %143 = vmatpush1.bf16.msra.mxu0 0
    %144 = vmatprep.subr.bf16.mxu0 0
    %145 = vmatpush1.bf16.msra.mxu0 0
    %146 = vmatprep.subr.bf16.mxu0 0
    %147 = vmatpush1.bf16.msra.mxu0 0
    %148 = vmatprep.subr.bf16.mxu0 0
    %149 = vmatpush1.bf16.msra.mxu0 0
    %150 = vmatprep.mubr.bf16.mxu0 0
    %151 = vmatmul.mubr.bf16.gmra.mrb[0].mxu0 %v62
    %v152 = vpop.f32.mrb[0].mxu0
    %v153 = vadd.f32 %v68, %v152
    %v154 = vpop.f32.mrb[0].mxu0
    %v155 = vpop.f32.mrb[0].mxu0
    %v156 = vadd.f32 %v68, %v155
    %v157 = vpop.f32.mrb[0].mxu0
    %158 = vdwg.mxu0
    %v159 = vxor.u32 %v153, 2147483648
    %v160 = vxor.u32 %v156, 2147483648
    %v161 = vmul.f32 %v159, 1.442695
    %v162 = vpow.pop %v161
    %v163 = vmul.f32 %v160, 1.442695
    %v164 = vpow.pop %v163
    %v165 = vadd.f32 %v162, 1.0
    %v166 = vadd.f32 %v164, 1.0
    %v167 = vrcp.pop %v165
    %v168 = vmul.f32 1.0, %v167
    %v169 = vrcp.pop %v166
    %v170 = vmul.f32 1.0, %v169
    %171 = vst [vmem:[#allocation7] sm:$0xff] %v168
    %172 = vst [vmem:[#allocation7 + $0x8] sm:$0xff] %v170
    // Predicated region
    $region22: #{_rbm_forward_impl.1} parent=1 // pred_check
      _
    $region23: #{_rbm_forward_impl.1} parent=1 // pred_check_branch
      %174 = sbr.rel (0) target = $region25
    $region24: #{_rbm_forward_impl.1} parent=1 // pred_region
      %s176 = ssub.s32 256, 128
      %177 = vsyncadd [#allocation4], %s176
      %s178 = sshll.u32 [#allocation7], 4
      %s179 = int_to_ptr.vmem [resolvable:$true] %s178
      %184 = dma.vmem_to_hbm [thread:$0]  %s179, 128, %s3, [#allocation4], 128, 128, 8
    $region25: #{_rbm_forward_impl.1} parent=1 // pred_fallthru
      _
    // Predicated region
    $region26: #{_rbm_forward_impl.1} parent=1 // pred_check
      _
    $region27: #{_rbm_forward_impl.1} parent=1 // pred_check_branch
      %186 = sbr.rel (0) target = $region29
    $region28: #{_rbm_forward_impl.1} parent=1 // pred_region
      %187 = dma.done [#allocation4], 256
    $region29: #{_rbm_forward_impl.1} parent=1 // pred_fallthru
      _
    %188 = vsyncpa [#allocation3], 1
    %189 = vsyncpa [#allocation6], 1
    %190 = vsyncpa [#allocation4], 1

</llo_original>
